<compile_context>
chip_gen: v6e
topology: v6e:2x2x1
jax: 0.10.0
libtpu: 0.0.40
codegen_flags: <defaults>
</compile_context>

<pallas_src>
import jax
import jax.numpy as jnp
from jax.experimental import pallas as pl
from jax.experimental.pallas import tpu as pltpu


def _round_up(v: int, m: int) -> int:
    return ((v + m - 1) // m) * m


def spose_kernel(x_ref, w_ref, ids_ref, slope_ref, icept_ref, o_ref, acc_ref):
    k = pl.program_id(2)

    @pl.when(k == 0)
    def _():
        acc_ref[...] = jnp.zeros_like(acc_ref)

    # x_tile (tm, tk) @ w_tile (tn, tk)^T -> (tm, tn), f32 accumulation on MXU.
    acc_ref[...] += jax.lax.dot_general(
        x_ref[...], w_ref[...],
        dimension_numbers=(((1,), (1,)), ((), ())),
        preferred_element_type=jnp.float32)

    @pl.when(k == pl.num_programs(2) - 1)
    def _():
        ids = ids_ref[...]                       # (tm, 1) int32
        tm = ids.shape[0]
        p_pad = slope_ref.shape[0]
        # One-hot row gather from the VMEM-resident embedding tables
        # (num_participants is tiny, so this is a cheap extra MXU op).
        onehot = (jax.lax.broadcasted_iota(jnp.int32, (tm, p_pad), 1)
                  == ids).astype(jnp.float32)    # (tm, P_pad)
        slope = jnp.dot(onehot, slope_ref[...],
                        preferred_element_type=jnp.float32)   # (tm, tn)
        icept = jnp.dot(onehot, icept_ref[...],
                        preferred_element_type=jnp.float32)   # (tm, tn)
        # Fused elementwise epilogue in f32 (safe on v5e: no bf16 VPU needed).
        o_ref[...] = (icept + slope * acc_ref[...]).astype(o_ref.dtype)


def spose_id_ic_forward(x, ids, fc_weight, slopes_table, intercepts_table,
                        *, tm_max=256, tn_max=512, tk_max=512):
    """x: (B, in_size) f32; ids: (B,) int; fc_weight: (out_size, in_size);
    slopes_table / intercepts_table: (num_participants, out_size)."""
    B, in_size = x.shape
    out_size = fc_weight.shape[0]
    P = slopes_table.shape[0]

    # Tile sizes: sublane/lane aligned, capped so double-buffered tiles stay
    # far below even v7x's 64 MiB VMEM.
    tm = min(_round_up(B, 8), tm_max)
    tn = min(_round_up(out_size, 128), tn_max)
    tk = min(_round_up(in_size, 128), tk_max)

    B_p = _round_up(B, tm)
    out_p = _round_up(out_size, tn)
    in_p = _round_up(in_size, tk)
    P_p = _round_up(P, 8)

    # Zero-pad once in the wrapper; padded rows/cols contribute zeros and the
    # padded output region is sliced off (and is exactly zero anyway).
    x_p = jnp.zeros((B_p, in_p), x.dtype).at[:B, :in_size].set(x)
    w_p = jnp.zeros((out_p, in_p), fc_weight.dtype).at[:out_size, :in_size].set(fc_weight)
    sl_p = jnp.zeros((P_p, out_p), slopes_table.dtype).at[:P, :out_size].set(slopes_table)
    ic_p = jnp.zeros((P_p, out_p), intercepts_table.dtype).at[:P, :out_size].set(intercepts_table)
    ids_p = jnp.zeros((B_p, 1), jnp.int32).at[:B, 0].set(ids.astype(jnp.int32))

    grid = (B_p // tm, out_p // tn, in_p // tk)

    itemsize = 4
    flops = 2 * B_p * in_p * out_p + 4 * B_p * P_p * out_p + 3 * B_p * out_p
    bytes_accessed = itemsize * (x_p.size + w_p.size + sl_p.size + ic_p.size
                                 + ids_p.size + B_p * out_p)

    out = pl.pallas_call(
        spose_kernel,
        out_shape=jax.ShapeDtypeStruct((B_p, out_p), x.dtype),
        grid_spec=pltpu.PrefetchScalarGridSpec(
            num_scalar_prefetch=0,
            grid=grid,
            in_specs=[
                pl.BlockSpec((tm, tk), lambda i, j, k: (i, k)),    # x tile
                pl.BlockSpec((tn, tk), lambda i, j, k: (j, k)),    # weight tile (untransposed)
                pl.BlockSpec((tm, 1), lambda i, j, k: (i, 0)),     # ids column
                pl.BlockSpec((P_p, tn), lambda i, j, k: (0, j)),   # slopes table slab
                pl.BlockSpec((P_p, tn), lambda i, j, k: (0, j)),   # intercepts table slab
            ],
            out_specs=pl.BlockSpec((tm, tn), lambda i, j, k: (i, j)),
            scratch_shapes=[pltpu.VMEM((tm, tn), jnp.float32)],
        ),
        compiler_params=pltpu.CompilerParams(
            dimension_semantics=("parallel", "parallel", "arbitrary")),
        cost_estimate=pl.CostEstimate(
            flops=flops, transcendentals=0, bytes_accessed=bytes_accessed),
    )(x_p, w_p, ids_p, sl_p, ic_p)

    return out[:B, :out_size]


if __name__ == "__main__":
    # Small shapes consistent with the module.
    B = 8
    in_size = 32
    out_size = 16
    num_participants = 5

    key = jax.random.PRNGKey(0)
    k_x, k_id, k_fc, k_sl, k_ic = jax.random.split(key, 5)

    # Deterministic parameter init mirroring _initialize_weights():
    mean_avg, std_avg = 0.1, 0.01   # nn.Linear weight
    mean_id, std_id = 0.5, 0.15     # nn.Embedding weights
    fc_weight = mean_avg + std_avg * jax.random.normal(
        k_fc, (out_size, in_size), dtype=jnp.float32)
    slopes_table = mean_id + std_id * jax.random.normal(
        k_sl, (num_participants, out_size), dtype=jnp.float32)
    intercepts_table = mean_id + std_id * jax.random.normal(
        k_ic, (num_participants, out_size), dtype=jnp.float32)

    x = jax.random.normal(k_x, (B, in_size), dtype=jnp.float32)
    ids = jax.random.randint(k_id, (B,), 0, num_participants, dtype=jnp.int32)

    out = spose_id_ic_forward(x, ids, fc_weight, slopes_table, intercepts_table)
    out = jax.block_until_ready(out)

    # Pure-JAX reference check of the same semantics.
    ref = (jnp.take(intercepts_table, ids, axis=0)
           + jnp.take(slopes_table, ids, axis=0) * (x @ fc_weight.T))
    assert out.shape == (B, out_size)
    assert jnp.allclose(out, ref, atol=1e-5, rtol=1e-5)

    print("KERNEL_OK")
</pallas_src>

<mosaic_0001>
module attributes {stable_mosaic.version = 11 : i64} {
  func.func @spose_kernel(%arg0: i32, %arg1: i32, %arg2: i32, %arg3: memref<8x128xf32, #tpu.memory_space<vmem>>, %arg4: memref<128x128xf32, #tpu.memory_space<vmem>>, %arg5: memref<8x1xi32, #tpu.memory_space<vmem>>, %arg6: memref<8x128xf32, #tpu.memory_space<vmem>>, %arg7: memref<8x128xf32, #tpu.memory_space<vmem>>, %arg8: memref<8x128xf32, #tpu.memory_space<vmem>>, %arg9: memref<8x128xf32, #tpu.memory_space<vmem>>) attributes {dimension_semantics = [#tpu.dimension_semantics<parallel>, #tpu.dimension_semantics<parallel>, #tpu.dimension_semantics<arbitrary>], iteration_bounds = array<i64: 1, 1, 1>, scalar_prefetch = 0 : i64, scratch_operands = 1 : i64, tpu.core_type = #tpu.core_type<tc>, window_params = [{transform_indices = @transform_0, window_bounds = array<i64: 8, 128>}, {transform_indices = @transform_1, window_bounds = array<i64: 128, 128>}, {transform_indices = @transform_2, window_bounds = array<i64: 8, 1>}, {transform_indices = @transform_3, window_bounds = array<i64: 8, 128>}, {transform_indices = @transform_4, window_bounds = array<i64: 8, 128>}, {transform_indices = @transform_5, window_bounds = array<i64: 8, 128>}]} {
    %c0_i32 = arith.constant 0 : i32
    %0 = arith.cmpi eq, %arg2, %c0_i32 : i32
    %1 = arith.extui %0 : i1 to i32
    %c0_i32_0 = arith.constant 0 : i32
    %2 = arith.cmpi ne, %1, %c0_i32_0 : i32
    scf.if %2 {
      %cst_10 = arith.constant 0.000000e+00 : f32
      %12 = vector.broadcast %cst_10 : f32 to vector<8x128xf32>
      %c0_11 = arith.constant 0 : index
      %c0_12 = arith.constant 0 : index
      %13 = vector.load %arg9[%c0_11, %c0_12] : memref<8x128xf32, #tpu.memory_space<vmem>>, vector<8x128xf32>
      tpu.vector_store %arg9[%c0_11, %c0_12], %12 {strides = array<i32>} : memref<8x128xf32, #tpu.memory_space<vmem>>, vector<8x128xf32>,
    } else {
    }
    %c0 = arith.constant 0 : index
    %c0_1 = arith.constant 0 : index
    %3 = vector.load %arg9[%c0, %c0_1] : memref<8x128xf32, #tpu.memory_space<vmem>>, vector<8x128xf32>
    %c0_2 = arith.constant 0 : index
    %c0_3 = arith.constant 0 : index
    %4 = vector.load %arg3[%c0_2, %c0_3] : memref<8x128xf32, #tpu.memory_space<vmem>>, vector<8x128xf32>
    %c0_4 = arith.constant 0 : index
    %c0_5 = arith.constant 0 : index
    %5 = vector.load %arg4[%c0_4, %c0_5] : memref<128x128xf32, #tpu.memory_space<vmem>>, vector<128x128xf32>
    %cst = arith.constant dense<0.000000e+00> : vector<8x128xf32>
    %6 = tpu.matmul %4, %5, %cst {dimension_numbers = #tpu.dot_dimension_numbers<[1], [1], [0], [0], [0, 0, 1, 0], [], []>} : vector<8x128xf32>, vector<128x128xf32>, vector<8x128xf32> -> vector<8x128xf32>
    %7 = arith.addf %3, %6 : vector<8x128xf32>
    %c0_6 = arith.constant 0 : index
    %c0_7 = arith.constant 0 : index
    %8 = vector.load %arg9[%c0_6, %c0_7] : memref<8x128xf32, #tpu.memory_space<vmem>>, vector<8x128xf32>
    tpu.vector_store %arg9[%c0_6, %c0_7], %7 {strides = array<i32>} : memref<8x128xf32, #tpu.memory_space<vmem>>, vector<8x128xf32>,
    %c0_i32_8 = arith.constant 0 : i32
    %9 = arith.cmpi eq, %arg2, %c0_i32_8 : i32
    %10 = arith.extui %9 : i1 to i32
    %c0_i32_9 = arith.constant 0 : i32
    %11 = arith.cmpi ne, %10, %c0_i32_9 : i32
    scf.if %11 {
      %c0_10 = arith.constant 0 : index
      %c0_11 = arith.constant 0 : index
      %12 = vector.load %arg5[%c0_10, %c0_11] : memref<8x1xi32, #tpu.memory_space<vmem>>, vector<8x1xi32>
      %13 = tpu.iota {dimensions = array<i32: 1>} : vector<8x8xi32>
      %14 = vector.broadcast %12 : vector<8x1xi32> to vector<8x8xi32>
      %15 = arith.cmpi eq, %13, %14 : vector<8x8xi32>
      %16 = arith.extui %15 : vector<8x8xi1> to vector<8x8xi32>
      %17 = arith.sitofp %16 : vector<8x8xi32> to vector<8x8xf32>
      %c0_12 = arith.constant 0 : index
      %c0_13 = arith.constant 0 : index
      %18 = vector.load %arg6[%c0_12, %c0_13] : memref<8x128xf32, #tpu.memory_space<vmem>>, vector<8x128xf32>
      %cst_14 = arith.constant dense<0.000000e+00> : vector<8x128xf32>
      %19 = tpu.matmul %17, %18, %cst_14 {dimension_numbers = #tpu.dot_dimension_numbers<[1], [0], [0], [1], [0, 0, 1, 1], [], []>} : vector<8x8xf32>, vector<8x128xf32>, vector<8x128xf32> -> vector<8x128xf32>
      %c0_15 = arith.constant 0 : index
      %c0_16 = arith.constant 0 : index
      %20 = vector.load %arg7[%c0_15, %c0_16] : memref<8x128xf32, #tpu.memory_space<vmem>>, vector<8x128xf32>
      %cst_17 = arith.constant dense<0.000000e+00> : vector<8x128xf32>
      %21 = tpu.matmul %17, %20, %cst_17 {dimension_numbers = #tpu.dot_dimension_numbers<[1], [0], [0], [1], [0, 0, 1, 1], [], []>} : vector<8x8xf32>, vector<8x128xf32>, vector<8x128xf32> -> vector<8x128xf32>
      %c0_18 = arith.constant 0 : index
      %c0_19 = arith.constant 0 : index
      %22 = vector.load %arg9[%c0_18, %c0_19] : memref<8x128xf32, #tpu.memory_space<vmem>>, vector<8x128xf32>
      %23 = arith.mulf %19, %22 : vector<8x128xf32>
      %24 = arith.addf %21, %23 : vector<8x128xf32>
      %c0_20 = arith.constant 0 : index
      %c0_21 = arith.constant 0 : index
      %25 = vector.load %arg8[%c0_20, %c0_21] : memref<8x128xf32, #tpu.memory_space<vmem>>, vector<8x128xf32>
      tpu.vector_store %arg8[%c0_20, %c0_21], %24 {strides = array<i32>} : memref<8x128xf32, #tpu.memory_space<vmem>>, vector<8x128xf32>,
    } else {
    }
    return
  }
  func.func @transform_0(%arg0: i32, %arg1: i32, %arg2: i32) -> (i32, i32) {
    %c0_i32 = arith.constant 0 : i32
    return %arg0, %arg2 : i32, i32
  }
  func.func @transform_1(%arg0: i32, %arg1: i32, %arg2: i32) -> (i32, i32) {
    %c0_i32 = arith.constant 0 : i32
    return %arg1, %arg2 : i32, i32
  }
  func.func @transform_2(%arg0: i32, %arg1: i32, %arg2: i32) -> (i32, i32) {
    %c0_i32 = arith.constant 0 : i32
    %c0_i32_0 = arith.constant 0 : i32
    return %arg0, %c0_i32 : i32, i32
  }
  func.func @transform_3(%arg0: i32, %arg1: i32, %arg2: i32) -> (i32, i32) {
    %c0_i32 = arith.constant 0 : i32
    %c0_i32_0 = arith.constant 0 : i32
    return %c0_i32, %arg1 : i32, i32
  }
  func.func @transform_4(%arg0: i32, %arg1: i32, %arg2: i32) -> (i32, i32) {
    %c0_i32 = arith.constant 0 : i32
    %c0_i32_0 = arith.constant 0 : i32
    return %c0_i32, %arg1 : i32, i32
  }
  func.func @transform_5(%arg0: i32, %arg1: i32, %arg2: i32) -> (i32, i32) {
    %c0_i32 = arith.constant 0 : i32
    return %arg0, %arg1 : i32, i32
  }
}

</mosaic_0001>

<llo_original>
// kernel: tpu_custom_call.1
$region0: #{tpu_custom_call.1}
  #allocation0 [shape = 'u32[]', space=smem, size = 0x4, offset = 0x4, fixed_abs, tag = 'smem constant byte address 0x4 - core index']
  #allocation1 [shape = 'u32[144,128]{1,0:T(1,128)}', space=vmem, size = 0x12000, scoped, tag = 'internal scratch']
  #allocation2 [shape = 'f32[8,128]{1,0:T(8,128)}', space=vmem, size = 0x1000, scoped, tag = 'scratch operand']
  %s0 = inlined_call_operand.vmem [shape: f32[8,128], index: 0, kind: input, shape index: {}]
  %s1 = inlined_call_operand.hbm [shape: f32[128,128], index: 1, kind: input, shape index: {}]
  %s2 = inlined_call_operand.vmem [shape: s32[8,1], index: 2, kind: input, shape index: {}]
  %s3 = inlined_call_operand.hbm [shape: f32[8,128], index: 3, kind: input, shape index: {}]
  %s4 = inlined_call_operand.vmem [shape: f32[8,128], index: 4, kind: input, shape index: {}]
  %s5 = inlined_call_operand.hbm [shape: f32[8,128], index: 5, kind: output, shape index: {}]
  %s6 = sld [smem:[#allocation0]]
  $region46: #{tpu_custom_call.1} parent=0
    _
  %s8 = ssub.s32 1, %s6
  %s9 = scalar_select 0, %s8, %s6
  $region1: #{tpu_custom_call.1} parent=0
    #allocation3 [shape = 'u8[65536]{0}', space=vmem, size = 0x10000, scoped, tag = 'input window, operand 1, single buffered']
    #allocation4 [shape = 's32[1]{0}', space=sflag, size = 0x4, scoped, tag = 'scoped memory for tpu_custom_call.1']
    #allocation5 [shape = 's32[1]{0}', space=sflag, size = 0x4, scoped, tag = 'scoped memory for tpu_custom_call.1']
    #allocation6 [shape = 'u8[4096]{0}', space=vmem, size = 0x1000, scoped, tag = 'input window, operand 3, single buffered']
    #allocation7 [shape = 's32[1]{0}', space=sflag, size = 0x4, scoped, tag = 'scoped memory for tpu_custom_call.1']
    #allocation8 [shape = 'u8[4096]{0}', space=vmem, size = 0x1000, scoped, tag = 'output window, operand 0, single buffered']
    %10 = vsyncpa [#allocation4], 0
    %11 = vsyncpa [#allocation7], 0
    %12 = vsyncpa [#allocation5], 0
    // Predicated region
    $region2: #{tpu_custom_call.1} parent=1 // pred_check
      _
    $region3: #{tpu_custom_call.1} parent=1 // pred_check_branch
      %14 = sbr.rel (0) target = $region5
    $region4: #{tpu_custom_call.1} parent=1 // pred_region
      _
    $region5: #{tpu_custom_call.1} parent=1 // pred_fallthru
      _
    // Predicated region
    $region6: #{tpu_custom_call.1} parent=1 // pred_check
      _
    $region7: #{tpu_custom_call.1} parent=1 // pred_check_branch
      %16 = sbr.rel (0) target = $region9
    $region8: #{tpu_custom_call.1} parent=1 // pred_region
      %s18 = ssub.s32 2048, 2048
      %19 = vsyncadd [#allocation4], %s18
      %s20 = sshll.u32 [#allocation3], 4
      %s21 = int_to_ptr.vmem [resolvable:$true] %s20
      %26 = dma.hbm_to_vmem [thread:$0]  %s1, 2048, %s21, [#allocation4], 128, 128, 8
    $region9: #{tpu_custom_call.1} parent=1 // pred_fallthru
      _
    // Predicated region
    $region10: #{tpu_custom_call.1} parent=1 // pred_check
      _
    $region11: #{tpu_custom_call.1} parent=1 // pred_check_branch
      %28 = sbr.rel (0) target = $region13
    $region12: #{tpu_custom_call.1} parent=1 // pred_region
      _
    $region13: #{tpu_custom_call.1} parent=1 // pred_fallthru
      _
    // Predicated region
    $region14: #{tpu_custom_call.1} parent=1 // pred_check
      _
    $region15: #{tpu_custom_call.1} parent=1 // pred_check_branch
      %30 = sbr.rel (0) target = $region17
    $region16: #{tpu_custom_call.1} parent=1 // pred_region
      %s32 = ssub.s32 128, 128
      %33 = vsyncadd [#allocation7], %s32
      %s35 = sshll.u32 [#allocation6], 4
      %s36 = int_to_ptr.vmem [resolvable:$true] %s35
      %38 = dma.hbm_to_vmem [thread:$0]  %s3, 128, %s36, [#allocation7]
    $region17: #{tpu_custom_call.1} parent=1 // pred_fallthru
      _
    // Predicated region
    $region18: #{tpu_custom_call.1} parent=1 // pred_check
      _
    $region19: #{tpu_custom_call.1} parent=1 // pred_check_branch
      %40 = sbr.rel (0) target = $region21
    $region20: #{tpu_custom_call.1} parent=1 // pred_region
      _
    $region21: #{tpu_custom_call.1} parent=1 // pred_fallthru
      _
    // Predicated region
    $region22: #{tpu_custom_call.1} parent=1 // pred_check
      _
    $region23: #{tpu_custom_call.1} parent=1 // pred_check_branch
      %42 = sbr.rel (0) target = $region25
    $region24: #{tpu_custom_call.1} parent=1 // pred_region
      %43 = dma.done [#allocation4], 2048
    $region25: #{tpu_custom_call.1} parent=1 // pred_fallthru
      _
    // Predicated region
    $region26: #{tpu_custom_call.1} parent=1 // pred_check
      _
    $region27: #{tpu_custom_call.1} parent=1 // pred_check_branch
      %45 = sbr.rel (0) target = $region29
    $region28: #{tpu_custom_call.1} parent=1 // pred_region
      %46 = dma.done [#allocation7], 128
    $region29: #{tpu_custom_call.1} parent=1 // pred_fallthru
      _
    %p47 = scmp.eq.s32.totalorder 0, 0
    // Predicated region
    $region30: #{tpu_custom_call.1} parent=1 // pred_check
      %p48 = pneg %p47
    $region31: #{tpu_custom_call.1} parent=1 // pred_check_branch
      %50 = sbr.rel (%p48) target = $region33
    $region32: #{tpu_custom_call.1} parent=1 // pred_region
      %51 = vst [vmem:[#allocation2] sm:$0xff] 0.0
    $region33: #{tpu_custom_call.1} parent=1 // pred_fallthru
      _
    %v52 = vld [vmem:[#allocation2] sm:$0xff]
    %v53 = vld [vmem:[%s0] sm:$0xff]
    %v54 = vld [vmem:[#allocation3] sm:$0xff]
    %v55 = vld [vmem:[#allocation3 + $0x8] sm:$0xff]
    %v56 = vld [vmem:[#allocation3 + $0x10] sm:$0xff]
    %v57 = vld [vmem:[#allocation3 + $0x18] sm:$0xff]
    %v58 = vld [vmem:[#allocation3 + $0x20] sm:$0xff]
    %v59 = vld [vmem:[#allocation3 + $0x28] sm:$0xff]
    %v60 = vld [vmem:[#allocation3 + $0x30] sm:$0xff]
    %v61 = vld [vmem:[#allocation3 + $0x38] sm:$0xff]
    %v62 = vld [vmem:[#allocation3 + $0x40] sm:$0xff]
    %v63 = vld [vmem:[#allocation3 + $0x48] sm:$0xff]
    %v64 = vld [vmem:[#allocation3 + $0x50] sm:$0xff]
    %v65 = vld [vmem:[#allocation3 + $0x58] sm:$0xff]
    %v66 = vld [vmem:[#allocation3 + $0x60] sm:$0xff]
    %v67 = vld [vmem:[#allocation3 + $0x68] sm:$0xff]
    %v68 = vld [vmem:[#allocation3 + $0x70] sm:$0xff]
    %v69 = vld [vmem:[#allocation3 + $0x78] sm:$0xff]
    %70 = vmatprep.subr.mxu0 0.0
    %71 = vmatpush1.xpose.msra.mxu0 %v69
    %72 = vmatprep.subr.mxu0 0.0
    %73 = vmatpush1.xpose.msra.mxu0 %v68
    %74 = vmatprep.subr.mxu0 0.0
    %75 = vmatpush1.xpose.msra.mxu0 %v67
    %76 = vmatprep.subr.mxu0 0.0
    %77 = vmatpush1.xpose.msra.mxu0 %v66
    %78 = vmatprep.subr.mxu0 0.0
    %79 = vmatpush1.xpose.msra.mxu0 %v65
    %80 = vmatprep.subr.mxu0 0.0
    %81 = vmatpush1.xpose.msra.mxu0 %v64
    %82 = vmatprep.subr.mxu0 0.0
    %83 = vmatpush1.xpose.msra.mxu0 %v63
    %84 = vmatprep.subr.mxu0 0.0
    %85 = vmatpush1.xpose.msra.mxu0 %v62
    %86 = vmatprep.subr.mxu0 0.0
    %87 = vmatpush1.xpose.msra.mxu0 %v61
    %88 = vmatprep.subr.mxu0 0.0
    %89 = vmatpush1.xpose.msra.mxu0 %v60
    %90 = vmatprep.subr.mxu0 0.0
    %91 = vmatpush1.xpose.msra.mxu0 %v59
    %92 = vmatprep.subr.mxu0 0.0
    %93 = vmatpush1.xpose.msra.mxu0 %v58
    %94 = vmatprep.subr.mxu0 0.0
    %95 = vmatpush1.xpose.msra.mxu0 %v57
    %96 = vmatprep.subr.mxu0 0.0
    %97 = vmatpush1.xpose.msra.mxu0 %v56
    %98 = vmatprep.subr.mxu0 0.0
    %99 = vmatpush1.xpose.msra.mxu0 %v55
    %100 = vmatprep.subr.mxu0 0.0
    %101 = vmatpush1.xpose.msra.mxu0 %v54
    %102 = vmatprep.subr.mxu0 0.0
    %103 = vmatpush2.xpose.msra.mxu0 0.0
    %104 = vmatprep.subr.mxu0 0.0
    %105 = vmatpush2.xpose.msra.mxu0 0.0
    %106 = vmatprep.subr.mxu0 0.0
    %107 = vmatpush2.xpose.msra.mxu0 0.0
    %108 = vmatprep.subr.mxu0 0.0
    %109 = vmatpush2.xpose.msra.mxu0 0.0
    %110 = vmatprep.subr.mxu0 0.0
    %111 = vmatpush2.xpose.msra.mxu0 0.0
    %112 = vmatprep.subr.mxu0 0.0
    %113 = vmatpush2.xpose.msra.mxu0 0.0
    %114 = vmatprep.subr.mxu0 0.0
    %115 = vmatpush2.xpose.msra.mxu0 0.0
    %116 = vmatprep.subr.mxu0 0.0
    %117 = vmatpush2.xpose.msra.mxu0 0.0
    %118 = vmatprep.subr.mxu0 0.0
    %119 = vmatpush2.xpose.msra.mxu0 0.0
    %120 = vmatprep.subr.mxu0 0.0
    %121 = vmatpush2.xpose.msra.mxu0 0.0
    %122 = vmatprep.subr.mxu0 0.0
    %123 = vmatpush2.xpose.msra.mxu0 0.0
    %124 = vmatprep.subr.mxu0 0.0
    %125 = vmatpush2.xpose.msra.mxu0 0.0
    %126 = vmatprep.subr.mxu0 0.0
    %127 = vmatpush2.xpose.msra.mxu0 0.0
    %128 = vmatprep.subr.mxu0 0.0
    %129 = vmatpush2.xpose.msra.mxu0 0.0
    %130 = vmatprep.subr.mxu0 0.0
    %131 = vmatpush2.xpose.msra.mxu0 0.0
    %132 = vmatprep.subr.mxu0 0.0
    %133 = vmatpush2.xpose.msra.mxu0 0.0
    %134 = vmatprep.mubr.f32.mxu0 0.0
    %135 = vmatmul.mubr.f32.gmra.mxu0 %v53
    %v136 = vpop.f32.mrf.mxu0
    %v137 = vadd.f32 0.0, %v136
    %v138 = vpop.f32.mrf.mxu0
    %139 = vdwg.mxu0
    %v140 = vadd.f32 %v52, %v137
    %141 = vst [vmem:[#allocation2] sm:$0xff] %v140
    // Predicated region
    $region34: #{tpu_custom_call.1} parent=1 // pred_check
      %p142 = pneg %p47
    $region35: #{tpu_custom_call.1} parent=1 // pred_check_branch
      %144 = sbr.rel (%p142) target = $region37
    $region36: #{tpu_custom_call.1} parent=1 // pred_region
      %v145 = vld [vmem:[%s2] sm:$0xff]
      %v146 = vlaneseq
      %v147 = vand.u32 %v146, 127
      %148 = vset.pattern.permute.xlu0 0
      %149 = vperm.xlu0 %148, %v145
      %v150 = vpop.permute.xlu0 %149
      %vm151 = vcmp.eq.s32.totalorder %v147, %v150
      %v152 = vsel %vm151, 1, 0
      %v153 = vcvt.s32.f32 %v152
      %v154 = vld [vmem:[#allocation6] sm:$0xff]
      %vm155 = vcmask 64512
      %v157 = vsel %vm155, %v153, 0
      %159 = vmatprep.subr.mxu0 0.0
      %160 = vmatpush1.msra.mxu0 0.0
      %161 = vmatprep.subr.mxu0 0.0
      %162 = vmatpush1.msra.mxu0 0.0
      %163 = vmatprep.subr.mxu0 0.0
      %164 = vmatpush1.msra.mxu0 0.0
      %165 = vmatprep.subr.mxu0 0.0
      %166 = vmatpush1.msra.mxu0 0.0
      %167 = vmatprep.subr.mxu0 0.0
      %168 = vmatpush1.msra.mxu0 0.0
      %169 = vmatprep.subr.mxu0 0.0
      %170 = vmatpush1.msra.mxu0 0.0
      %171 = vmatprep.subr.mxu0 0.0
      %172 = vmatpush1.msra.mxu0 0.0
      %173 = vmatprep.subr.mxu0 0.0
      %174 = vmatpush1.msra.mxu0 0.0
      %175 = vmatprep.subr.mxu0 0.0
      %176 = vmatpush1.msra.mxu0 0.0
      %177 = vmatprep.subr.mxu0 0.0
      %178 = vmatpush1.msra.mxu0 0.0
      %179 = vmatprep.subr.mxu0 0.0
      %180 = vmatpush1.msra.mxu0 0.0
      %181 = vmatprep.subr.mxu0 0.0
      %182 = vmatpush1.msra.mxu0 0.0
      %183 = vmatprep.subr.mxu0 0.0
      %184 = vmatpush1.msra.mxu0 0.0
      %185 = vmatprep.subr.mxu0 0.0
      %186 = vmatpush1.msra.mxu0 0.0
      %187 = vmatprep.subr.mxu0 0.0
      %188 = vmatpush1.msra.mxu0 0.0
      %189 = vmatprep.subr.mxu0 0.0
      %190 = vmatpush1.msra.mxu0 %v154
      %191 = vmatprep.subr.mxu0 0.0
      %192 = vmatpush2.msra.mxu0 0.0
      %193 = vmatprep.subr.mxu0 0.0
      %194 = vmatpush2.msra.mxu0 0.0
      %195 = vmatprep.subr.mxu0 0.0
      %196 = vmatpush2.msra.mxu0 0.0
      %197 = vmatprep.subr.mxu0 0.0
      %198 = vmatpush2.msra.mxu0 0.0
      %199 = vmatprep.subr.mxu0 0.0
      %200 = vmatpush2.msra.mxu0 0.0
      %201 = vmatprep.subr.mxu0 0.0
      %202 = vmatpush2.msra.mxu0 0.0
      %203 = vmatprep.subr.mxu0 0.0
      %204 = vmatpush2.msra.mxu0 0.0
      %205 = vmatprep.subr.mxu0 0.0
      %206 = vmatpush2.msra.mxu0 0.0
      %207 = vmatprep.subr.mxu0 0.0
      %208 = vmatpush2.msra.mxu0 0.0
      %209 = vmatprep.subr.mxu0 0.0
      %210 = vmatpush2.msra.mxu0 0.0
      %211 = vmatprep.subr.mxu0 0.0
      %212 = vmatpush2.msra.mxu0 0.0
      %213 = vmatprep.subr.mxu0 0.0
      %214 = vmatpush2.msra.mxu0 0.0
      %215 = vmatprep.subr.mxu0 0.0
      %216 = vmatpush2.msra.mxu0 0.0
      %217 = vmatprep.subr.mxu0 0.0
      %218 = vmatpush2.msra.mxu0 0.0
      %219 = vmatprep.subr.mxu0 0.0
      %220 = vmatpush2.msra.mxu0 0.0
      %221 = vmatprep.subr.mxu0 0.0
      %222 = vmatpush2.msra.mxu0 0.0
      %223 = vmatprep.mubr.f32.mxu0 0.0
      %224 = vmatmul.mubr.f32.gmra.mxu0 %v157
      %v225 = vpop.f32.mrf.mxu0
      %v226 = vadd.f32 0.0, %v225
      %v227 = vpop.f32.mrf.mxu0
      %228 = vdwg.mxu0
      %v229 = vld [vmem:[%s4] sm:$0xff]
      %v230 = vld [vmem:[#allocation2] sm:$0xff]
      %v231 = vmul.f32 %v226, %v230
      %232 = vmatprep.subr.mxu0 0.0
      %233 = vmatpush1.msra.mxu0 0.0
      %234 = vmatprep.subr.mxu0 0.0
      %235 = vmatpush1.msra.mxu0 0.0
      %236 = vmatprep.subr.mxu0 0.0
      %237 = vmatpush1.msra.mxu0 0.0
      %238 = vmatprep.subr.mxu0 0.0
      %239 = vmatpush1.msra.mxu0 0.0
      %240 = vmatprep.subr.mxu0 0.0
      %241 = vmatpush1.msra.mxu0 0.0
      %242 = vmatprep.subr.mxu0 0.0
      %243 = vmatpush1.msra.mxu0 0.0
      %244 = vmatprep.subr.mxu0 0.0
      %245 = vmatpush1.msra.mxu0 0.0
      %246 = vmatprep.subr.mxu0 0.0
      %247 = vmatpush1.msra.mxu0 0.0
      %248 = vmatprep.subr.mxu0 0.0
      %249 = vmatpush1.msra.mxu0 0.0
      %250 = vmatprep.subr.mxu0 0.0
      %251 = vmatpush1.msra.mxu0 0.0
      %252 = vmatprep.subr.mxu0 0.0
      %253 = vmatpush1.msra.mxu0 0.0
      %254 = vmatprep.subr.mxu0 0.0
      %255 = vmatpush1.msra.mxu0 0.0
      %256 = vmatprep.subr.mxu0 0.0
      %257 = vmatpush1.msra.mxu0 0.0
      %258 = vmatprep.subr.mxu0 0.0
      %259 = vmatpush1.msra.mxu0 0.0
      %260 = vmatprep.subr.mxu0 0.0
      %261 = vmatpush1.msra.mxu0 0.0
      %262 = vmatprep.subr.mxu0 0.0
      %263 = vmatpush1.msra.mxu0 %v229
      %264 = vmatprep.subr.mxu0 0.0
      %265 = vmatpush2.msra.mxu0 0.0
      %266 = vmatprep.subr.mxu0 0.0
      %267 = vmatpush2.msra.mxu0 0.0
      %268 = vmatprep.subr.mxu0 0.0
      %269 = vmatpush2.msra.mxu0 0.0
      %270 = vmatprep.subr.mxu0 0.0
      %271 = vmatpush2.msra.mxu0 0.0
      %272 = vmatprep.subr.mxu0 0.0
      %273 = vmatpush2.msra.mxu0 0.0
      %274 = vmatprep.subr.mxu0 0.0
      %275 = vmatpush2.msra.mxu0 0.0
      %276 = vmatprep.subr.mxu0 0.0
      %277 = vmatpush2.msra.mxu0 0.0
      %278 = vmatprep.subr.mxu0 0.0
      %279 = vmatpush2.msra.mxu0 0.0
      %280 = vmatprep.subr.mxu0 0.0
      %281 = vmatpush2.msra.mxu0 0.0
      %282 = vmatprep.subr.mxu0 0.0
      %283 = vmatpush2.msra.mxu0 0.0
      %284 = vmatprep.subr.mxu0 0.0
      %285 = vmatpush2.msra.mxu0 0.0
      %286 = vmatprep.subr.mxu0 0.0
      %287 = vmatpush2.msra.mxu0 0.0
      %288 = vmatprep.subr.mxu0 0.0
      %289 = vmatpush2.msra.mxu0 0.0
      %290 = vmatprep.subr.mxu0 0.0
      %291 = vmatpush2.msra.mxu0 0.0
      %292 = vmatprep.subr.mxu0 0.0
      %293 = vmatpush2.msra.mxu0 0.0
      %294 = vmatprep.subr.mxu0 0.0
      %295 = vmatpush2.msra.mxu0 0.0
      %296 = vmatprep.mubr.f32.mxu0 0.0
      %297 = vmatmul.mubr.f32.gmra.mxu0 %v157
      %v298 = vpop.f32.mrf.mxu0
      %v299 = vadd.f32 %v231, %v298
      %v300 = vpop.f32.mrf.mxu0
      %301 = vdwg.mxu0
      %302 = vst [vmem:[#allocation8] sm:$0xff] %v299
    $region37: #{tpu_custom_call.1} parent=1 // pred_fallthru
      _
    // Predicated region
    $region38: #{tpu_custom_call.1} parent=1 // pred_check
      _
    $region39: #{tpu_custom_call.1} parent=1 // pred_check_branch
      %304 = sbr.rel (0) target = $region41
    $region40: #{tpu_custom_call.1} parent=1 // pred_region
      %s306 = ssub.s32 128, 128
      %307 = vsyncadd [#allocation5], %s306
      %s309 = sshll.u32 [#allocation8], 4
      %s310 = int_to_ptr.vmem [resolvable:$true] %s309
      %312 = dma.vmem_to_hbm [thread:$0]  %s310, 128, %s5, [#allocation5]
    $region41: #{tpu_custom_call.1} parent=1 // pred_fallthru
      _
    // Predicated region
    $region42: #{tpu_custom_call.1} parent=1 // pred_check
      _
    $region43: #{tpu_custom_call.1} parent=1 // pred_check_branch
      %314 = sbr.rel (0) target = $region45
    $region44: #{tpu_custom_call.1} parent=1 // pred_region
      %315 = dma.done [#allocation5], 128
    $region45: #{tpu_custom_call.1} parent=1 // pred_fallthru
      _
    %316 = vsyncpa [#allocation4], 1
    %317 = vsyncpa [#allocation7], 1
    %318 = vsyncpa [#allocation5], 1

</llo_original>
